<compile_context>
chip_gen: v7x
topology: tpu7x:2x2x1
jax: 0.10.0
libtpu: 0.0.40
codegen_flags: <defaults>
</compile_context>

<pallas_src>
import jax
import jax.numpy as jnp
from jax.experimental import pallas as pl
from jax.experimental.pallas import tpu as pltpu

_LANE = 128
_LANE_CANDIDATES = (32768, 16384, 8192, 4096, 2048, 1024, 512, 256, 128)


def _scale_kernel(scale_ref, x_ref, o_ref):
    # scale_ref: SMEM (1,) scalar (same dtype as x); x_ref/o_ref: VMEM tiles.
    o_ref[...] = (x_ref[...] * scale_ref[0]).astype(o_ref.dtype)


def _sublane_for(dtype) -> int:
    """Minimum sublane multiple for this dtype: 8 (f32), 16 (bf16), 32 (i8/fp8)."""
    itemsize = jnp.dtype(dtype).itemsize
    return 8 * max(1, 4 // itemsize)


def _is_v7x() -> bool:
    try:
        kind = jax.devices()[0].device_kind.lower()
    except Exception:  # pragma: no cover - no devices / CPU fallback
        return False
    return "v7" in kind


def scale_forward(
    x,
    scale,
    *,
    target_block_bytes: int | None = None,
    min_pallas_bytes: int = 1 << 20,
    donate_x: bool = False,
):
    """y = x * scale (scalar broadcast). x: any-shape float tensor, scale: shape (1,)."""
    orig_shape = x.shape
    dtype = x.dtype
    itemsize = jnp.dtype(dtype).itemsize
    n_elem = x.size
    n_bytes = n_elem * itemsize

    # Scalar cast in the wrapper: avoids f32 promotion of bf16 tiles in-kernel.
    scale_arr = jnp.asarray(scale, dtype=dtype).reshape((1,))

    sublane = _sublane_for(dtype)
    min_chunk = sublane * _LANE  # one full vreg tile of this dtype

    # Fallbacks: tiny inputs (pallas_call setup dominates) and ragged sizes
    # (avoid extra pad/concat + slice HBM passes) go straight to XLA.
    if n_elem == 0 or n_bytes < min_pallas_bytes or (n_elem % min_chunk) != 0:
        return x * scale_arr[0]

    # Widest lane dim (multiple of 128) that keeps the row count a multiple of
    # the dtype's sublane granularity — lane-dense output is the biggest
    # single lever for elementwise kernels.
    lanes = _LANE
    for cand in _LANE_CANDIDATES:
        if n_elem % (sublane * cand) == 0:
            lanes = cand
            break
    rows = n_elem // lanes
    x2d = jnp.reshape(x, (rows, lanes))

    # Block sizing: ~4 MiB per grid step (8 MiB on v7x to amortize the
    # ~0.35 us per-step overhead against ~3.2 TB/s HBM).
    if target_block_bytes is None:
        target_block_bytes = (8 << 20) if _is_v7x() else (4 << 20)
    bytes_per_row = lanes * itemsize
    tr = (target_block_bytes // bytes_per_row) // sublane * sublane
    tr = max(sublane, min(tr, rows))
    grid = (pl.cdiv(rows, tr),)  # partial final block handled by Pallas

    # 2 arrays x 2 pipeline buffers x block, plus headroom; 32 MiB min.
    block_bytes = tr * bytes_per_row
    vmem_limit = min(48 << 20, max(32 << 20, 4 * block_bytes + (8 << 20)))

    out2d = pl.pallas_call(
        _scale_kernel,
        out_shape=jax.ShapeDtypeStruct((rows, lanes), dtype),
        grid_spec=pltpu.PrefetchScalarGridSpec(
            num_scalar_prefetch=0,
            grid=grid,
            in_specs=[
                pl.BlockSpec(memory_space=pltpu.SMEM),        # scale scalar
                pl.BlockSpec((tr, lanes), lambda i: (i, 0)),  # x tile
            ],
            out_specs=pl.BlockSpec((tr, lanes), lambda i: (i, 0)),
        ),
        compiler_params=pltpu.CompilerParams(
            dimension_semantics=("parallel",),
            vmem_limit_bytes=vmem_limit,
        ),
        input_output_aliases=({1: 0} if donate_x else {}),
    )(scale_arr, x2d)

    return jnp.reshape(out2d, orig_shape)


if __name__ == "__main__":
    key = jax.random.PRNGKey(0)

    # nn.Parameter(torch.FloatTensor([init_value])); use a non-trivial value.
    scale = jnp.array([1.5], dtype=jnp.float32)

    # NCHW, small shape consistent with the module (batch=2, channels=4, 16x16).
    # Force the Pallas path (the small-input fallback would otherwise route
    # this 8 KiB tensor through plain XLA).
    x = jax.random.normal(key, (2, 4, 16, 16), dtype=jnp.float32)
    y = jax.block_until_ready(scale_forward(x, scale, min_pallas_bytes=0))
    assert y.shape == x.shape and y.dtype == x.dtype
    assert jnp.allclose(y, x * scale[0], atol=1e-6, rtol=1e-6)

    # bf16 path: exercises the dtype-aware (16,128) sublane tiling.
    x_bf16 = jax.random.normal(jax.random.PRNGKey(1), (2, 4, 16, 16)).astype(jnp.bfloat16)
    y_bf16 = jax.block_until_ready(scale_forward(x_bf16, scale, min_pallas_bytes=0))
    assert y_bf16.dtype == jnp.bfloat16
    assert jnp.allclose(
        y_bf16.astype(jnp.float32),
        (x_bf16.astype(jnp.float32) * 1.5).astype(jnp.bfloat16).astype(jnp.float32),
        atol=1e-2, rtol=1e-2,
    )

    # Ragged shape: routed through the XLA fallback (no pad/slice HBM passes).
    x_odd = jax.random.normal(jax.random.PRNGKey(2), (3, 5, 7, 11), dtype=jnp.float32)
    y_odd = jax.block_until_ready(scale_forward(x_odd, scale, min_pallas_bytes=0))
    assert y_odd.shape == x_odd.shape
    assert jnp.allclose(y_odd, x_odd * scale[0], atol=1e-6, rtol=1e-6)

    # Slightly larger shape: exercises the default (non-forced) Pallas path
    # and the wide-lane selection (2*8*128*128 = 262144 elems = 1 MiB).
    x_big = jax.random.normal(jax.random.PRNGKey(3), (2, 8, 128, 128), dtype=jnp.float32)
    y_big = jax.block_until_ready(scale_forward(x_big, scale))
    assert jnp.allclose(y_big, x_big * scale[0], atol=1e-6, rtol=1e-6)

    print("KERNEL_OK")
</pallas_src>

<mosaic_0001>
module attributes {stable_mosaic.version = 11 : i64} {
  func.func @_scale_kernel(%arg0: i32, %arg1: memref<1xf32, #tpu.memory_space<smem>>, %arg2: memref<8x256xf32, #tpu.memory_space<vmem>>, %arg3: memref<8x256xf32, #tpu.memory_space<vmem>>) attributes {dimension_semantics = [#tpu.dimension_semantics<parallel>], iteration_bounds = array<i64: 1>, scalar_prefetch = 0 : i64, scratch_operands = 0 : i64, tpu.core_type = #tpu.core_type<tc>, window_params = [{transform_indices = @transform_0, window_bounds = array<i64: 1>}, {transform_indices = @transform_1, window_bounds = array<i64: 8, 256>}, {transform_indices = @transform_2, window_bounds = array<i64: 8, 256>}]} {
    %c0 = arith.constant 0 : index
    %c0_0 = arith.constant 0 : index
    %0 = vector.load %arg2[%c0, %c0_0] : memref<8x256xf32, #tpu.memory_space<vmem>>, vector<8x256xf32>
    %c0_1 = arith.constant 0 : index
    %1 = memref.load %arg1[%c0_1] : memref<1xf32, #tpu.memory_space<smem>>
    %2 = vector.broadcast %1 : f32 to vector<8x256xf32>
    %3 = arith.mulf %0, %2 : vector<8x256xf32>
    %c0_2 = arith.constant 0 : index
    %c0_3 = arith.constant 0 : index
    %4 = vector.load %arg3[%c0_2, %c0_3] : memref<8x256xf32, #tpu.memory_space<vmem>>, vector<8x256xf32>
    tpu.vector_store %arg3[%c0_2, %c0_3], %3 {strides = array<i32>} : memref<8x256xf32, #tpu.memory_space<vmem>>, vector<8x256xf32>,
    return
  }
  func.func @transform_0(%arg0: i32) -> i32 {
    %c0_i32 = arith.constant 0 : i32
    %c0_i32_0 = arith.constant 0 : i32
    return %c0_i32 : i32
  }
  func.func @transform_1(%arg0: i32) -> (i32, i32) {
    %c0_i32 = arith.constant 0 : i32
    %c0_i32_0 = arith.constant 0 : i32
    return %arg0, %c0_i32 : i32, i32
  }
  func.func @transform_2(%arg0: i32) -> (i32, i32) {
    %c0_i32 = arith.constant 0 : i32
    %c0_i32_0 = arith.constant 0 : i32
    return %arg0, %c0_i32 : i32, i32
  }
}

</mosaic_0001>

<llo_original>
// kernel: tpu_custom_call.1
$region0: #{tpu_custom_call.1}
  #allocation0 [shape = 'u32[]', space=smem, size = 0x4, offset = 0x4, fixed_abs, tag = 'smem constant byte address 0x4 - core index']
  #allocation1 [shape = 'u32[144,128]{1,0:T(1,128)}', space=vmem, size = 0x12000, scoped, tag = 'internal scratch']
  #allocation2 [shape = 'f32[1]{0:T(128)S(6)}', space=smem, size = 0x200, scoped, tag = 'scoped memory for tpu_custom_call.1']
  %s0 = inlined_call_operand.<no memory space> [shape: f32[1], index: 0, kind: input, shape index: {}]
  %s1 = inlined_call_operand.hbm [shape: f32[8,256], index: 1, kind: input, shape index: {}]
  %s2 = inlined_call_operand.hbm [shape: f32[8,256], index: 2, kind: output, shape index: {}]
  %s3 = sld [smem:[#allocation0]]
  $region22: #{tpu_custom_call.1} parent=0
    _
  %s5 = ssub.s32 1, %s3
  %s6 = scalar_select 0, %s5, %s3
  %7 = sst [smem:[#allocation2]] %s0
  $region1: #{tpu_custom_call.1} parent=0
    #allocation3 [shape = 'u8[8192]{0}', space=vmem, size = 0x2000, scoped, tag = 'input window, operand 1, single buffered']
    #allocation4 [shape = 's32[1]{0}', space=sflag, size = 0x4, scoped, tag = 'scoped memory for tpu_custom_call.1']
    #allocation5 [shape = 's32[1]{0}', space=sflag, size = 0x4, scoped, tag = 'scoped memory for tpu_custom_call.1']
    #allocation6 [shape = 'u8[8192]{0}', space=vmem, size = 0x2000, scoped, tag = 'output window, operand 0, single buffered']
    %8 = vsyncpa [#allocation4], 0
    %9 = vsyncpa [#allocation5], 0
    // Predicated region
    $region2: #{tpu_custom_call.1} parent=1 // pred_check
      _
    $region3: #{tpu_custom_call.1} parent=1 // pred_check_branch
      %11 = sbr.rel (0) target = $region5
    $region4: #{tpu_custom_call.1} parent=1 // pred_region
      _
    $region5: #{tpu_custom_call.1} parent=1 // pred_fallthru
      _
    // Predicated region
    $region6: #{tpu_custom_call.1} parent=1 // pred_check
      _
    $region7: #{tpu_custom_call.1} parent=1 // pred_check_branch
      %13 = sbr.rel (0) target = $region9
    $region8: #{tpu_custom_call.1} parent=1 // pred_region
      %s15 = ssub.s32 256, 256
      %16 = vsyncadd [#allocation4], %s15
      %s18 = sshll.u32 [#allocation3], 4
      %s19 = int_to_ptr.vmem [resolvable:$true] %s18
      %21 = dma.hbm_to_vmem [thread:$0]  %s1, 256, %s19, [#allocation4]
    $region9: #{tpu_custom_call.1} parent=1 // pred_fallthru
      _
    // Predicated region
    $region10: #{tpu_custom_call.1} parent=1 // pred_check
      _
    $region11: #{tpu_custom_call.1} parent=1 // pred_check_branch
      %23 = sbr.rel (0) target = $region13
    $region12: #{tpu_custom_call.1} parent=1 // pred_region
      %24 = dma.done [#allocation4], 256
    $region13: #{tpu_custom_call.1} parent=1 // pred_fallthru
      _
    %v25 = vld [vmem:[#allocation3] sm:$0xff]
    %v26 = vld [vmem:[#allocation3 + $0x8] sm:$0xff]
    %s27 = sld [smem:[#allocation2]]
    %v28 = vstv %s27
    %v29 = vmul.f32 %v25, %v28
    %v30 = vmul.f32 %v26, %v28
    %31 = vst [vmem:[#allocation6] sm:$0xff] %v29
    %32 = vst [vmem:[#allocation6 + $0x8] sm:$0xff] %v30
    // Predicated region
    $region14: #{tpu_custom_call.1} parent=1 // pred_check
      _
    $region15: #{tpu_custom_call.1} parent=1 // pred_check_branch
      %34 = sbr.rel (0) target = $region17
    $region16: #{tpu_custom_call.1} parent=1 // pred_region
      %s36 = ssub.s32 256, 256
      %37 = vsyncadd [#allocation5], %s36
      %s39 = sshll.u32 [#allocation6], 4
      %s40 = int_to_ptr.vmem [resolvable:$true] %s39
      %42 = dma.vmem_to_hbm [thread:$0]  %s40, 256, %s2, [#allocation5]
    $region17: #{tpu_custom_call.1} parent=1 // pred_fallthru
      _
    // Predicated region
    $region18: #{tpu_custom_call.1} parent=1 // pred_check
      _
    $region19: #{tpu_custom_call.1} parent=1 // pred_check_branch
      %44 = sbr.rel (0) target = $region21
    $region20: #{tpu_custom_call.1} parent=1 // pred_region
      %45 = dma.done [#allocation5], 256
    $region21: #{tpu_custom_call.1} parent=1 // pred_fallthru
      _
    %46 = vsyncpa [#allocation4], 1
    %47 = vsyncpa [#allocation5], 1

</llo_original>
